<compile_context>
chip_gen: v6e
topology: v6e:2x2x1
jax: 0.10.0
libtpu: 0.0.40
codegen_flags: <defaults>
</compile_context>

<pallas_src>
import jax
import jax.numpy as jnp
import numpy as np
from jax import lax
from jax.experimental import pallas as pl
from jax.experimental.pallas import tpu as pltpu


def _cbam_head_kernel(x_ref, w1_ref, w2t_ref, wc_ref, cmb_ref, const_ref, out_ref):
    # x_ref: (bb, C, HW) native NCHW-flattened block (bf16 or f32).
    bb, C, HW = x_ref.shape
    inv_hw = 1.0 / float(HW)

    # On-chip relayout to lane-dense C (XLU is otherwise nearly idle here);
    # upcast to f32 so the elementwise math is valid on v5e as well.
    x = jnp.transpose(x_ref[...].astype(jnp.float32), (0, 2, 1))      # (bb, HW, C)

    # ---- channel attention: HW (sublane) pooling + shared MLP on the MXU ----
    ch_avg = jnp.sum(x, axis=1) * inv_hw                              # (bb, C)
    ch_max = jnp.max(x, axis=1)                                       # (bb, C)
    s = jnp.concatenate([ch_avg, ch_max], axis=0)                     # (2*bb, C)
    h = jnp.maximum(
        lax.dot_general(s, w1_ref[...], (((1,), (1,)), ((), ())),
                        preferred_element_type=jnp.float32), 0.0)     # (2*bb, Cr)
    o = jnp.dot(h, w2t_ref[...], preferred_element_type=jnp.float32)  # (2*bb, C)
    ch_att = jax.nn.sigmoid(o[:bb] + o[bb:])                          # (bb, C)
    x1 = x * ch_att[:, None, :]                                       # (bb, HW, C)

    # ---- lane-axis (C) reductions moved onto the (otherwise idle) MXU:
    #      one matmul against [1/C | w_fc*bn_scale] gives both the spatial
    #      avg map and the fused BN/FC projection y.  Only max-over-C stays
    #      as an XLU lane reduce. ----
    x1_2d = x1.reshape(bb * HW, C)                                    # free leading collapse
    red = jnp.dot(x1_2d, cmb_ref[...],
                  preferred_element_type=jnp.float32)                 # (bb*HW, 2)
    red = red.reshape(bb, HW, 2)
    avg_map = red[:, :, 0]                                            # mean over C
    y = red[:, :, 1]                                                  # sum_c w_eff[c]*x1
    max_map = jnp.max(x1, axis=2)                                     # (bb, HW)

    # ---- 7x7 'SAME' spatial conv as ONE MXU matmul (K = 2*HW = 128) ----
    maps = jnp.concatenate([avg_map, max_map], axis=1)                # (bb, 2*HW)
    smap = jnp.dot(maps, wc_ref[...],
                   preferred_element_type=jnp.float32)                # (bb, HW)
    g = jax.nn.sigmoid(smap)

    # ---- fused global-avg-pool + BatchNorm1d(eval) + Dropout(eval) + Linear ----
    out_ref[0, 0, :] = jnp.sum(g * y, axis=1) * inv_hw + const_ref[0]


def _spatial_conv_matrix(w_sp, H, W):
    """(2,k,k) conv weights -> exact (2*HW, HW) 'SAME' correlation operator.

    Built sparsely (direct scatter of the k*k taps), no dense selector tensor.
    """
    w = np.asarray(w_sp, np.float32)
    k = int(w.shape[-1])
    p = k // 2
    HW = H * W
    op = np.zeros((2 * HW, HW), np.float32)
    for ky in range(k):
        for kx in range(k):
            for yo in range(H):
                yi = yo + ky - p
                if yi < 0 or yi >= H:
                    continue
                for xo in range(W):
                    xi = xo + kx - p
                    if xi < 0 or xi >= W:
                        continue
                    for i in range(2):
                        op[i * HW + yi * W + xi, yo * W + xo] += w[i, ky, kx]
    return jnp.asarray(op)


def prepare_cbam_head_params(params, H, W, eps=1e-5):
    """Fold all constants once (hoisted out of the per-call path)."""
    w1 = jnp.asarray(params["w1"], jnp.float32)               # (Cr, C)
    w2t = jnp.asarray(params["w2"], jnp.float32).T            # (Cr, C), lane-dense
    C = w1.shape[1]
    w_conv = _spatial_conv_matrix(params["w_spatial"], H, W)  # (2*HW, HW)
    bn_scale = params["gamma"] / jnp.sqrt(params["rvar"] + eps)
    bn_shift = params["beta"] - params["rmean"] * bn_scale
    w_eff = (params["w_fc"][0] * bn_scale).astype(jnp.float32)            # (C,)
    cmb = jnp.stack([jnp.full((C,), 1.0 / C, jnp.float32), w_eff], axis=1)  # (C, 2)
    const = (jnp.dot(params["w_fc"][0].astype(jnp.float32),
                     bn_shift.astype(jnp.float32))
             + params["b_fc"][0]).reshape(1).astype(jnp.float32)
    return dict(w1=w1, w2t=w2t, w_conv=w_conv, cmb=cmb, const=const)


def _choose_batch_block(B, C, HW, itemsize, *, target_bytes=2 << 20, min_blocks=2):
    """~1-4 MB x-blocks, but keep >=2 grid steps when B allows (pipelining +
    both v7x TensorCores); batches that don't divide are padded, not shrunk."""
    per_sample = max(1, C * HW * itemsize)
    bb = max(1, target_bytes // per_sample)
    if B >= min_blocks:
        bb = min(bb, max(1, B // min_blocks))
    return int(min(bb, max(1, B)))


def tumor_classifier_cbam_head(x, prep, *, target_block_bytes=2 << 20):
    """x: (B, C, H, W) backbone feature map (NCHW, f32 or bf16) -> (B, 1) logits."""
    B, C, H, W = x.shape
    HW = H * W
    Cr = prep["w1"].shape[0]

    bb = _choose_batch_block(B, C, HW, x.dtype.itemsize,
                             target_bytes=target_block_bytes)
    nblk = int(pl.cdiv(B, bb))
    Bp = nblk * bb

    # Free contiguous collapse of (H, W) -> HW; NO transpose pass in HBM.
    x_r = x.reshape(B, C, HW)
    if Bp != B:
        x_r = jnp.pad(x_r, ((0, Bp - B), (0, 0), (0, 0)))

    flops = B * (8 * C * Cr + 7 * HW * C + 4 * HW * HW)
    bytes_accessed = (Bp * C * HW * x.dtype.itemsize
                      + 4 * (2 * Cr * C + 2 * HW * HW + 2 * C + 1)
                      + 4 * Bp)

    out = pl.pallas_call(
        _cbam_head_kernel,
        grid=(nblk,),
        in_specs=[
            pl.BlockSpec((bb, C, HW), lambda i: (i, 0, 0)),        # x block (native NCHW)
            pl.BlockSpec((Cr, C), lambda i: (0, 0)),               # MLP W1
            pl.BlockSpec((Cr, C), lambda i: (0, 0)),               # MLP W2^T
            pl.BlockSpec((2 * HW, HW), lambda i: (0, 0)),          # spatial conv operator
            pl.BlockSpec((C, 2), lambda i: (0, 0)),                # [1/C | w_fc*bn_scale]
            pl.BlockSpec(memory_space=pltpu.MemorySpace.SMEM),     # fused scalar const
        ],
        out_specs=pl.BlockSpec((1, 1, bb), lambda i: (i, 0, 0)),
        out_shape=jax.ShapeDtypeStruct((nblk, 1, bb), jnp.float32),
        compiler_params=pltpu.CompilerParams(
            dimension_semantics=("parallel",)),
        cost_estimate=pl.CostEstimate(
            flops=int(flops),
            transcendentals=int(B * (C + HW)),
            bytes_accessed=int(bytes_accessed)),
    )(x_r, prep["w1"], prep["w2t"], prep["w_conv"], prep["cmb"], prep["const"])
    return out.reshape(Bp, 1)[:B]


def reference_forward(x, p, eps=1e-5):
    """Plain-JAX reference of the same (post-backbone) forward, NCHW."""
    avg = jnp.mean(x, axis=(2, 3))
    mx = jnp.max(x, axis=(2, 3))

    def mlp(v):
        return jnp.maximum(v @ p["w1"].T, 0.0) @ p["w2"].T

    att = jax.nn.sigmoid(mlp(avg) + mlp(mx))
    x1 = x * att[:, :, None, None]
    amap = jnp.mean(x1, axis=1, keepdims=True)
    mmap = jnp.max(x1, axis=1, keepdims=True)
    maps = jnp.concatenate([amap, mmap], axis=1)
    smap = lax.conv_general_dilated(
        maps, p["w_spatial"], (1, 1), "SAME",
        dimension_numbers=("NCHW", "OIHW", "NCHW"))
    x2 = x1 * jax.nn.sigmoid(smap)
    pooled = jnp.mean(x2, axis=(2, 3))
    z = (pooled - p["rmean"]) / jnp.sqrt(p["rvar"] + eps) * p["gamma"] + p["beta"]
    return z @ p["w_fc"].T + p["b_fc"]


if __name__ == "__main__":
    # Small shapes consistent with the module: CBAM(channel=C, reduction=16,
    # kernel=7) on a backbone feature map; original C=1280 scaled down to 128.
    B, C, H, W = 2, 128, 8, 8
    reduction, ksize = 16, 7
    Cr = C // reduction
    eps = 1e-5

    key = jax.random.PRNGKey(0)
    ks = jax.random.split(key, 10)
    x_f32 = jax.random.normal(ks[0], (B, C, H, W), jnp.float32)   # backbone feature map
    w1 = 0.1 * jax.random.normal(ks[1], (Cr, C), jnp.float32)     # Conv2d(C, C//r, 1, bias=False)
    w2 = 0.1 * jax.random.normal(ks[2], (C, Cr), jnp.float32)     # Conv2d(C//r, C, 1, bias=False)
    w_spatial = 0.1 * jax.random.normal(ks[3], (1, 2, ksize, ksize), jnp.float32)
    gamma = 1.0 + 0.1 * jax.random.normal(ks[4], (C,), jnp.float32)
    beta = 0.1 * jax.random.normal(ks[5], (C,), jnp.float32)
    rmean = 0.1 * jax.random.normal(ks[6], (C,), jnp.float32)
    rvar = jax.random.uniform(ks[7], (C,), jnp.float32, minval=0.5, maxval=1.5)
    w_fc = 0.1 * jax.random.normal(ks[8], (1, C), jnp.float32)    # Linear(C, 1)
    b_fc = 0.1 * jax.random.normal(ks[9], (1,), jnp.float32)

    params = dict(w1=w1, w2=w2, w_spatial=w_spatial.reshape(2, ksize, ksize),
                  gamma=gamma, beta=beta, rmean=rmean, rvar=rvar,
                  w_fc=w_fc, b_fc=b_fc)

    # Constant folding hoisted out of the per-call path (done once).
    prep = prepare_cbam_head_params(params, H, W, eps=eps)

    # Feature map shipped in bf16 (as a bf16 backbone would emit) -> halves the
    # dominant HBM stream; in-kernel compute is f32.
    x_bf16 = x_f32.astype(jnp.bfloat16)

    out = tumor_classifier_cbam_head(x_bf16, prep)
    out = jax.block_until_ready(out)

    ref = reference_forward(
        x_bf16.astype(jnp.float32),
        dict(w1=w1, w2=w2, w_spatial=w_spatial, gamma=gamma, beta=beta,
             rmean=rmean, rvar=rvar, w_fc=w_fc, b_fc=b_fc), eps=eps)

    assert out.shape == (B, 1)
    np.testing.assert_allclose(np.asarray(out), np.asarray(ref), rtol=2e-3, atol=2e-3)
    print("KERNEL_OK")
</pallas_src>

<mosaic_0001>
module attributes {stable_mosaic.version = 11 : i64} {
  func.func @_cbam_head_kernel(%arg0: i32, %arg1: memref<1x128x64xbf16, #tpu.memory_space<vmem>>, %arg2: memref<8x128xf32, #tpu.memory_space<vmem>>, %arg3: memref<8x128xf32, #tpu.memory_space<vmem>>, %arg4: memref<128x64xf32, #tpu.memory_space<vmem>>, %arg5: memref<128x2xf32, #tpu.memory_space<vmem>>, %arg6: memref<1xf32, #tpu.memory_space<smem>>, %arg7: memref<1x1x1xf32, #tpu.memory_space<vmem>>) attributes {dimension_semantics = [#tpu.dimension_semantics<parallel>], iteration_bounds = array<i64: 2>, scalar_prefetch = 0 : i64, scratch_operands = 0 : i64, tpu.core_type = #tpu.core_type<tc>, window_params = [{transform_indices = @transform_0, window_bounds = array<i64: 1, 128, 64>}, {pipeline_mode = #tpu.pipeline_mode<synchronous>, transform_indices = @transform_1, window_bounds = array<i64: 8, 128>}, {pipeline_mode = #tpu.pipeline_mode<synchronous>, transform_indices = @transform_2, window_bounds = array<i64: 8, 128>}, {pipeline_mode = #tpu.pipeline_mode<synchronous>, transform_indices = @transform_3, window_bounds = array<i64: 128, 64>}, {pipeline_mode = #tpu.pipeline_mode<synchronous>, transform_indices = @transform_4, window_bounds = array<i64: 128, 2>}, {transform_indices = @transform_5, window_bounds = array<i64: 1>}, {transform_indices = @transform_6, window_bounds = array<i64: 1, 1, 1>}]} {
    %c0 = arith.constant 0 : index
    %c0_0 = arith.constant 0 : index
    %c0_1 = arith.constant 0 : index
    %0 = vector.load %arg1[%c0, %c0_0, %c0_1] : memref<1x128x64xbf16, #tpu.memory_space<vmem>>, vector<1x128x64xbf16>
    %1 = arith.extf %0 : vector<1x128x64xbf16> to vector<1x128x64xf32>
    %2 = tpu.transpose %1, [0, 2, 1] : vector<1x128x64xf32> -> vector<1x64x128xf32>
    %cst = arith.constant dense<0.000000e+00> : vector<1x128xf32>
    %3 = vector.multi_reduction <add>, %2, %cst [1] : vector<1x64x128xf32> to vector<1x128xf32>
    %cst_2 = arith.constant 1.562500e-02 : f32
    %4 = vector.broadcast %cst_2 : f32 to vector<1x128xf32>
    %5 = arith.mulf %3, %4 : vector<1x128xf32>
    %cst_3 = arith.constant dense<0xFF800000> : vector<1x128xf32>
    %6 = vector.multi_reduction <maximumf>, %2, %cst_3 [1] : vector<1x64x128xf32> to vector<1x128xf32>
    %7 = tpu.concatenate %5, %6 in 0 : vector<1x128xf32>, vector<1x128xf32> -> vector<2x128xf32>
    %c0_4 = arith.constant 0 : index
    %c0_5 = arith.constant 0 : index
    %8 = vector.load %arg2[%c0_4, %c0_5] : memref<8x128xf32, #tpu.memory_space<vmem>>, vector<8x128xf32>
    %cst_6 = arith.constant dense<0.000000e+00> : vector<2x8xf32>
    %9 = tpu.matmul %7, %8, %cst_6 {dimension_numbers = #tpu.dot_dimension_numbers<[1], [1], [0], [0], [0, 0, 1, 0], [], []>} : vector<2x128xf32>, vector<8x128xf32>, vector<2x8xf32> -> vector<2x8xf32>
    %cst_7 = arith.constant 0.000000e+00 : f32
    %10 = vector.broadcast %cst_7 : f32 to vector<2x8xf32>
    %11 = arith.maximumf %9, %10 : vector<2x8xf32>
    %c0_8 = arith.constant 0 : index
    %c0_9 = arith.constant 0 : index
    %12 = vector.load %arg3[%c0_8, %c0_9] : memref<8x128xf32, #tpu.memory_space<vmem>>, vector<8x128xf32>
    %cst_10 = arith.constant dense<0.000000e+00> : vector<2x128xf32>
    %13 = tpu.matmul %11, %12, %cst_10 {dimension_numbers = #tpu.dot_dimension_numbers<[1], [0], [0], [1], [0, 0, 1, 1], [], []>} : vector<2x8xf32>, vector<8x128xf32>, vector<2x128xf32> -> vector<2x128xf32>
    %14 = vector.extract_strided_slice %13 {offsets = [0, 0], sizes = [1, 128], strides = [1, 1]} : vector<2x128xf32> to vector<1x128xf32>
    %15 = vector.extract_strided_slice %13 {offsets = [1, 0], sizes = [1, 128], strides = [1, 1]} : vector<2x128xf32> to vector<1x128xf32>
    %16 = arith.addf %14, %15 : vector<1x128xf32>
    %17 = arith.negf %16 : vector<1x128xf32>
    %18 = math.exp %17 : vector<1x128xf32>
    %cst_11 = arith.constant 1.000000e+00 : f32
    %19 = vector.broadcast %cst_11 : f32 to vector<1x128xf32>
    %20 = arith.addf %19, %18 : vector<1x128xf32>
    %21 = arith.divf %19, %20 : vector<1x128xf32>
    %22 = vector.shape_cast %21 : vector<1x128xf32> to vector<1x1x128xf32>
    %23 = vector.broadcast %22 : vector<1x1x128xf32> to vector<1x64x128xf32>
    %24 = arith.mulf %2, %23 : vector<1x64x128xf32>
    %25 = vector.shape_cast %24 : vector<1x64x128xf32> to vector<64x128xf32>
    %c0_12 = arith.constant 0 : index
    %c0_13 = arith.constant 0 : index
    %26 = vector.load %arg5[%c0_12, %c0_13] : memref<128x2xf32, #tpu.memory_space<vmem>>, vector<128x2xf32>
    %cst_14 = arith.constant dense<0.000000e+00> : vector<64x2xf32>
    %27 = tpu.matmul %25, %26, %cst_14 {dimension_numbers = #tpu.dot_dimension_numbers<[1], [0], [0], [1], [0, 0, 1, 1], [], []>} : vector<64x128xf32>, vector<128x2xf32>, vector<64x2xf32> -> vector<64x2xf32>
    %28 = vector.shape_cast %27 : vector<64x2xf32> to vector<1x64x2xf32>
    %29 = vector.extract_strided_slice %28 {offsets = [0, 0, 0], sizes = [1, 64, 1], strides = [1, 1, 1]} : vector<1x64x2xf32> to vector<1x64x1xf32>
    %30 = vector.shape_cast %29 : vector<1x64x1xf32> to vector<1x64xf32>
    %31 = vector.extract_strided_slice %28 {offsets = [0, 0, 1], sizes = [1, 64, 1], strides = [1, 1, 1]} : vector<1x64x2xf32> to vector<1x64x1xf32>
    %32 = vector.shape_cast %31 : vector<1x64x1xf32> to vector<1x64xf32>
    %cst_15 = arith.constant dense<0xFF800000> : vector<1x64xf32>
    %33 = vector.multi_reduction <maximumf>, %24, %cst_15 [2] : vector<1x64x128xf32> to vector<1x64xf32>
    %34 = tpu.concatenate %30, %33 in 1 : vector<1x64xf32>, vector<1x64xf32> -> vector<1x128xf32>
    %c0_16 = arith.constant 0 : index
    %c0_17 = arith.constant 0 : index
    %35 = vector.load %arg4[%c0_16, %c0_17] : memref<128x64xf32, #tpu.memory_space<vmem>>, vector<128x64xf32>
    %cst_18 = arith.constant dense<0.000000e+00> : vector<1x64xf32>
    %36 = tpu.matmul %34, %35, %cst_18 {dimension_numbers = #tpu.dot_dimension_numbers<[1], [0], [0], [1], [0, 0, 1, 1], [], []>} : vector<1x128xf32>, vector<128x64xf32>, vector<1x64xf32> -> vector<1x64xf32>
    %37 = arith.negf %36 : vector<1x64xf32>
    %38 = math.exp %37 : vector<1x64xf32>
    %cst_19 = arith.constant 1.000000e+00 : f32
    %39 = vector.broadcast %cst_19 : f32 to vector<1x64xf32>
    %40 = arith.addf %39, %38 : vector<1x64xf32>
    %41 = arith.divf %39, %40 : vector<1x64xf32>
    %42 = arith.mulf %41, %32 : vector<1x64xf32>
    %cst_20 = arith.constant dense<0.000000e+00> : vector<1xf32>
    %43 = vector.multi_reduction <add>, %42, %cst_20 [1] : vector<1x64xf32> to vector<1xf32>
    %cst_21 = arith.constant 1.562500e-02 : f32
    %44 = vector.broadcast %cst_21 : f32 to vector<1xf32>
    %45 = arith.mulf %43, %44 : vector<1xf32>
    %c0_22 = arith.constant 0 : index
    %46 = memref.load %arg6[%c0_22] : memref<1xf32, #tpu.memory_space<smem>>
    %47 = vector.broadcast %46 : f32 to vector<1xf32>
    %48 = arith.addf %45, %47 : vector<1xf32>
    %c0_23 = arith.constant 0 : index
    %c0_24 = arith.constant 0 : index
    %c0_25 = arith.constant 0 : index
    %49 = vector.load %arg7[%c0_23, %c0_24, %c0_25] : memref<1x1x1xf32, #tpu.memory_space<vmem>>, vector<1x1x1xf32>
    %50 = vector.shape_cast %49 : vector<1x1x1xf32> to vector<1xf32>
    %51 = vector.shape_cast %48 : vector<1xf32> to vector<1x1x1xf32>
    tpu.vector_store %arg7[%c0_23, %c0_24, %c0_25], %51 {strides = array<i32>} : memref<1x1x1xf32, #tpu.memory_space<vmem>>, vector<1x1x1xf32>,
    return
  }
  func.func @transform_0(%arg0: i32) -> (i32, i32, i32) {
    %c0_i32 = arith.constant 0 : i32
    %c0_i32_0 = arith.constant 0 : i32
    %c0_i32_1 = arith.constant 0 : i32
    return %arg0, %c0_i32, %c0_i32_0 : i32, i32, i32
  }
  func.func @transform_1(%arg0: i32) -> (i32, i32) {
    %c0_i32 = arith.constant 0 : i32
    %c0_i32_0 = arith.constant 0 : i32
    %c0_i32_1 = arith.constant 0 : i32
    return %c0_i32, %c0_i32_0 : i32, i32
  }
  func.func @transform_2(%arg0: i32) -> (i32, i32) {
    %c0_i32 = arith.constant 0 : i32
    %c0_i32_0 = arith.constant 0 : i32
    %c0_i32_1 = arith.constant 0 : i32
    return %c0_i32, %c0_i32_0 : i32, i32
  }
  func.func @transform_3(%arg0: i32) -> (i32, i32) {
    %c0_i32 = arith.constant 0 : i32
    %c0_i32_0 = arith.constant 0 : i32
    %c0_i32_1 = arith.constant 0 : i32
    return %c0_i32, %c0_i32_0 : i32, i32
  }
  func.func @transform_4(%arg0: i32) -> (i32, i32) {
    %c0_i32 = arith.constant 0 : i32
    %c0_i32_0 = arith.constant 0 : i32
    %c0_i32_1 = arith.constant 0 : i32
    return %c0_i32, %c0_i32_0 : i32, i32
  }
  func.func @transform_5(%arg0: i32) -> i32 {
    %c0_i32 = arith.constant 0 : i32
    %c0_i32_0 = arith.constant 0 : i32
    return %c0_i32 : i32
  }
  func.func @transform_6(%arg0: i32) -> (i32, i32, i32) {
    %c0_i32 = arith.constant 0 : i32
    %c0_i32_0 = arith.constant 0 : i32
    %c0_i32_1 = arith.constant 0 : i32
    return %arg0, %c0_i32, %c0_i32_0 : i32, i32, i32
  }
}

</mosaic_0001>

<llo_original>
// kernel: tpu_custom_call.1
$region0: #{tpu_custom_call.1}
  #allocation0 [shape = 'u32[]', space=smem, size = 0x4, offset = 0x4, fixed_abs, tag = 'smem constant byte address 0x4 - core index']
  #allocation1 [shape = 'u32[144,128]{1,0:T(1,128)}', space=vmem, size = 0x12000, scoped, tag = 'internal scratch']
  #allocation2 [shape = 'f32[1]{0:T(128)S(6)}', space=smem, size = 0x200, scoped, tag = 'scoped memory for tpu_custom_call.1']
  %s0 = inlined_call_operand.vmem [shape: bf16[2,128,64], index: 0, kind: input, shape index: {}]
  %s1 = inlined_call_operand.vmem [shape: f32[8,128], index: 1, kind: input, shape index: {}]
  %s2 = inlined_call_operand.vmem [shape: f32[8,128], index: 2, kind: input, shape index: {}]
  %s3 = inlined_call_operand.vmem [shape: f32[128,64], index: 3, kind: input, shape index: {}]
  %s4 = inlined_call_operand.vmem [shape: f32[128,2], index: 4, kind: input, shape index: {}]
  %s5 = inlined_call_operand.<no memory space> [shape: f32[1], index: 5, kind: input, shape index: {}]
  %s6 = inlined_call_operand.vmem [shape: f32[2,1,1], index: 6, kind: output, shape index: {}]
  %s7 = sld [smem:[#allocation0]]
  $region57: #{tpu_custom_call.1} parent=0
    _
  %s9 = ssub.s32 1, %s7
  %s10 = scalar_select 0, %s9, %s7
  %11 = sst [smem:[#allocation2]] %s5
  loop: start=0, step=1, limit=4
  $region2: #{tpu_custom_call.1} parent=0 // loop_pre_header
    _
  $region3: #{tpu_custom_call.1} parent=0 // loop_header
    %s13 = sphi 0, %s17
    %p14 = scmp.ge.s32.totalorder %s13, 4
    %s23 = sphi 0, %s25
    %s26 = sphi 0, %s23
    %s27 = sphi 0, %s26
    %s43 = sphi 0, %s27
    %s47 = sphi 0, %s47
    %s49 = sphi 0, %s47
    %s50 = sphi 0, %s49
    %s64 = sphi 0, %s50
    %s68 = sphi 0, %s68
    %s70 = sphi 0, %s68
    %s71 = sphi 0, %s70
    %s85 = sphi 0, %s71
    %s89 = sphi 0, %s89
    %s91 = sphi 0, %s89
    %s92 = sphi 0, %s91
    %s106 = sphi 0, %s92
    %s110 = sphi 0, %s110
    %s112 = sphi 0, %s110
    %s113 = sphi 0, %s112
    %s127 = sphi 0, %s113
    %s131 = sphi 0, %s131
    %s133 = sphi 0, %s131
    %s134 = sphi 0, %s133
    %s148 = sphi 0, %s134
    %s154 = sphi 0, %s156
    %s157 = sphi 0, %s154
    %s158 = sphi 0, %s157
    %s174 = sphi 0, %s158
  $region4: #{tpu_custom_call.1} parent=0 // loop_header_branch
    %16 = sbr.rel (%p14) target = $region8
  $region5: #{tpu_custom_call.1} parent=0 // loop_body
    %s18 = ssub.s32 %s13, 1
    %s19 = ssub.s32 %s13, 2
    %s20 = sadd.s32 %s13, 1
    %s21 = ssub.s32 %s13, %s20
    %p22 = scmp.eq.s32.totalorder %s21, 0
    %s24 = sadd.s32 %s23, 1
    %s25 = scalar_select %p22, %s23, %s24
    %p28 = pneg %p22
    %p29 = scmp.eq.s32.totalorder %s13, 1
    %p30 = por %p28, %p29
    %p31 = scmp.ne.s32.totalorder %s23, %s26
    %p32 = scmp.eq.s32.totalorder %s13, 0
    %p33 = por %p31, %p32
    %p34 = scmp.ne.s32.totalorder %s23, %s26
    %p35 = scmp.eq.s32.totalorder %s18, 1
    %p36 = por %p34, %p35
    %p37 = scmp.ne.s32.totalorder %s26, %s27
    %p38 = scmp.eq.s32.totalorder %s18, 0
    %p39 = por %p37, %p38
    %p40 = scmp.ne.s32.totalorder %s26, %s27
    %p41 = scmp.eq.s32.totalorder %s19, 1
    %p42 = por %p40, %p41
    %p44 = scmp.ne.s32.totalorder %s27, %s43
    %p45 = scmp.eq.s32.totalorder %s19, 0
    %p46 = por %p44, %p45
    %s48 = sadd.s32 %s47, 1
    %p51 = scmp.eq.s32.totalorder %s13, 1
    %p52 = scmp.ne.s32.totalorder %s47, %s49
    %p53 = scmp.eq.s32.totalorder %s13, 0
    %p54 = por %p52, %p53
    %p55 = scmp.ne.s32.totalorder %s47, %s49
    %p56 = scmp.eq.s32.totalorder %s18, 1
    %p57 = por %p55, %p56
    %p58 = scmp.ne.s32.totalorder %s49, %s50
    %p59 = scmp.eq.s32.totalorder %s18, 0
    %p60 = por %p58, %p59
    %p61 = scmp.ne.s32.totalorder %s49, %s50
    %p62 = scmp.eq.s32.totalorder %s19, 1
    %p63 = por %p61, %p62
    %p65 = scmp.ne.s32.totalorder %s50, %s64
    %p66 = scmp.eq.s32.totalorder %s19, 0
    %p67 = por %p65, %p66
    %s69 = sadd.s32 %s68, 1
    %p72 = scmp.eq.s32.totalorder %s13, 1
    %p73 = scmp.ne.s32.totalorder %s68, %s70
    %p74 = scmp.eq.s32.totalorder %s13, 0
    %p75 = por %p73, %p74
    %p76 = scmp.ne.s32.totalorder %s68, %s70
    %p77 = scmp.eq.s32.totalorder %s18, 1
    %p78 = por %p76, %p77
    %p79 = scmp.ne.s32.totalorder %s70, %s71
    %p80 = scmp.eq.s32.totalorder %s18, 0
    %p81 = por %p79, %p80
    %p82 = scmp.ne.s32.totalorder %s70, %s71
    %p83 = scmp.eq.s32.totalorder %s19, 1
    %p84 = por %p82, %p83
    %p86 = scmp.ne.s32.totalorder %s71, %s85
    %p87 = scmp.eq.s32.totalorder %s19, 0
    %p88 = por %p86, %p87
    %s90 = sadd.s32 %s89, 1
    %p93 = scmp.eq.s32.totalorder %s13, 1
    %p94 = scmp.ne.s32.totalorder %s89, %s91
    %p95 = scmp.eq.s32.totalorder %s13, 0
    %p96 = por %p94, %p95
    %p97 = scmp.ne.s32.totalorder %s89, %s91
    %p98 = scmp.eq.s32.totalorder %s18, 1
    %p99 = por %p97, %p98
    %p100 = scmp.ne.s32.totalorder %s91, %s92
    %p101 = scmp.eq.s32.totalorder %s18, 0
    %p102 = por %p100, %p101
    %p103 = scmp.ne.s32.totalorder %s91, %s92
    %p104 = scmp.eq.s32.totalorder %s19, 1
    %p105 = por %p103, %p104
    %p107 = scmp.ne.s32.totalorder %s92, %s106
    %p108 = scmp.eq.s32.totalorder %s19, 0
    %p109 = por %p107, %p108
    %s111 = sadd.s32 %s110, 1
    %p114 = scmp.eq.s32.totalorder %s13, 1
    %p115 = scmp.ne.s32.totalorder %s110, %s112
    %p116 = scmp.eq.s32.totalorder %s13, 0
    %p117 = por %p115, %p116
    %p118 = scmp.ne.s32.totalorder %s110, %s112
    %p119 = scmp.eq.s32.totalorder %s18, 1
    %p120 = por %p118, %p119
    %p121 = scmp.ne.s32.totalorder %s112, %s113
    %p122 = scmp.eq.s32.totalorder %s18, 0
    %p123 = por %p121, %p122
    %p124 = scmp.ne.s32.totalorder %s112, %s113
    %p125 = scmp.eq.s32.totalorder %s19, 1
    %p126 = por %p124, %p125
    %p128 = scmp.ne.s32.totalorder %s113, %s127
    %p129 = scmp.eq.s32.totalorder %s19, 0
    %p130 = por %p128, %p129
    %s132 = sadd.s32 %s131, 1
    %p135 = scmp.eq.s32.totalorder %s13, 1
    %p136 = scmp.ne.s32.totalorder %s131, %s133
    %p137 = scmp.eq.s32.totalorder %s13, 0
    %p138 = por %p136, %p137
    %p139 = scmp.ne.s32.totalorder %s131, %s133
    %p140 = scmp.eq.s32.totalorder %s18, 1
    %p141 = por %p139, %p140
    %p142 = scmp.ne.s32.totalorder %s133, %s134
    %p143 = scmp.eq.s32.totalorder %s18, 0
    %p144 = por %p142, %p143
    %p145 = scmp.ne.s32.totalorder %s133, %s134
    %p146 = scmp.eq.s32.totalorder %s19, 1
    %p147 = por %p145, %p146
    %p149 = scmp.ne.s32.totalorder %s134, %s148
    %p150 = scmp.eq.s32.totalorder %s19, 0
    %p151 = por %p149, %p150
    %s152 = ssub.s32 %s13, %s20
    %p153 = scmp.eq.s32.totalorder %s152, 0
    %s155 = sadd.s32 %s154, 1
    %s156 = scalar_select %p153, %s154, %s155
    %p159 = pneg %p153
    %p160 = scmp.eq.s32.totalorder %s13, 1
    %p161 = por %p159, %p160
    %p162 = scmp.ne.s32.totalorder %s154, %s157
    %p163 = scmp.eq.s32.totalorder %s13, 0
    %p164 = por %p162, %p163
    %p165 = scmp.ne.s32.totalorder %s154, %s157
    %p166 = scmp.eq.s32.totalorder %s18, 1
    %p167 = por %p165, %p166
    %p168 = scmp.ne.s32.totalorder %s157, %s158
    %p169 = scmp.eq.s32.totalorder %s18, 0
    %p170 = por %p168, %p169
    %p171 = scmp.ne.s32.totalorder %s157, %s158
    %p172 = scmp.eq.s32.totalorder %s19, 1
    %p173 = por %p171, %p172
    %p175 = scmp.ne.s32.totalorder %s158, %s174
    %p176 = scmp.eq.s32.totalorder %s19, 0
    %p177 = por %p175, %p176
    %p178 = scmp.le.s32.totalorder 1, %s13
    %p179 = scmp.lt.s32.totalorder %s13, 3
    %p180 = pnand %p178, %p179
    %p181 = pneg %p180
    // Predicated region
    $region9: #{tpu_custom_call.1} parent=5 // pred_check
      _
    $region10: #{tpu_custom_call.1} parent=5 // pred_check_branch
      %183 = sbr.rel (%p180) target = $region12
    $region11: #{tpu_custom_call.1} parent=5 // pred_region
      %s184 = ssub.s32 %s13, 1
      // Predicated region
      $region13: #{tpu_custom_call.1} parent=11 // pred_check
        %p185 = pneg %p60
      $region14: #{tpu_custom_call.1} parent=11 // pred_check_branch
        %187 = sbr.rel (%p185) target = $region16
      $region15: #{tpu_custom_call.1} parent=11 // pred_region
        _
      $region16: #{tpu_custom_call.1} parent=11 // pred_fallthru
        _
      // Predicated region
      $region17: #{tpu_custom_call.1} parent=11 // pred_check
        %p188 = pneg %p81
      $region18: #{tpu_custom_call.1} parent=11 // pred_check_branch
        %190 = sbr.rel (%p188) target = $region20
      $region19: #{tpu_custom_call.1} parent=11 // pred_region
        _
      $region20: #{tpu_custom_call.1} parent=11 // pred_fallthru
        _
      // Predicated region
      $region21: #{tpu_custom_call.1} parent=11 // pred_check
        %p191 = pneg %p102
      $region22: #{tpu_custom_call.1} parent=11 // pred_check_branch
        %193 = sbr.rel (%p191) target = $region24
      $region23: #{tpu_custom_call.1} parent=11 // pred_region
        _
      $region24: #{tpu_custom_call.1} parent=11 // pred_fallthru
        _
      // Predicated region
      $region25: #{tpu_custom_call.1} parent=11 // pred_check
        %p194 = pneg %p123
      $region26: #{tpu_custom_call.1} parent=11 // pred_check_branch
        %196 = sbr.rel (%p194) target = $region28
      $region27: #{tpu_custom_call.1} parent=11 // pred_region
        _
      $region28: #{tpu_custom_call.1} parent=11 // pred_fallthru
        _
      // Predicated region
      $region29: #{tpu_custom_call.1} parent=11 // pred_check
        %p197 = pneg %p144
      $region30: #{tpu_custom_call.1} parent=11 // pred_check_branch
        %199 = sbr.rel (%p197) target = $region32
      $region31: #{tpu_custom_call.1} parent=11 // pred_region
        _
      $region32: #{tpu_custom_call.1} parent=11 // pred_fallthru
        _
    $region12: #{tpu_custom_call.1} parent=5 // pred_fallthru
      _
    %p200 = scmp.lt.s32.totalorder %s13, 2
    // Predicated region
    $region33: #{tpu_custom_call.1} parent=5 // pred_check
      %p201 = pneg %p200
    $region34: #{tpu_custom_call.1} parent=5 // pred_check_branch
      %203 = sbr.rel (%p201) target = $region36
    $region35: #{tpu_custom_call.1} parent=5 // pred_region
      // Predicated region
      $region37: #{tpu_custom_call.1} parent=35 // pred_check
        %p204 = pneg %p33
      $region38: #{tpu_custom_call.1} parent=35 // pred_check_branch
        %206 = sbr.rel (%p204) target = $region40
      $region39: #{tpu_custom_call.1} parent=35 // pred_region
        %p207 = scmp.lt.s32.totalorder %s13, 1
        %s208 = scalar_select %p207, %s13, 1
        %s209 = smul.addr %s208, 16
        %s210 = smul.addr %s209, 4
        %s211 = scalar_lea.vmem %s0, %s210
      $region40: #{tpu_custom_call.1} parent=35 // pred_fallthru
        _
    $region36: #{tpu_custom_call.1} parent=5 // pred_fallthru
      _
    %p212 = scmp.le.s32.totalorder 1, %s13
    %p213 = scmp.lt.s32.totalorder %s13, 3
    %p214 = pnand %p212, %p213
    %p215 = pneg %p214
    // Predicated region
    $region41: #{tpu_custom_call.1} parent=5 // pred_check
      _
    $region42: #{tpu_custom_call.1} parent=5 // pred_check_branch
      %217 = sbr.rel (%p214) target = $region44
    $region43: #{tpu_custom_call.1} parent=5 // pred_region
      %s218 = ssub.s32 %s13, 1
      %p219 = scmp.lt.s32.totalorder %s18, 1
      %s220 = scalar_select %p219, %s18, 1
      %s221 = smul.addr %s220, 16
      %s222 = smul.addr %s221, 4
      %s223 = scalar_lea.vmem %s0, %s222
      %p224 = pneg %p39
      %p225 = pneg %p36
      %p226 = pneg %p60
      %p227 = pneg %p57
      %p228 = pneg %p81
      %p229 = pneg %p78
      %p230 = pneg %p102
      %p231 = pneg %p99
      %p232 = pneg %p123
      %p233 = pneg %p120
      %p234 = pneg %p144
      %p235 = pneg %p141
      %p236 = pneg %p170
      %p237 = pneg %p167
      %p238 = scmp.lt.s32.totalorder %s18, 1
      %s239 = scalar_select %p238, %s18, 1
      %s240 = scalar_lea.vmem %s6, %s239
      %p241 = scmp.lt.s32.totalorder %s18, 1
      %s242 = scalar_select %p241, %s18, 1
      %s243 = smul.addr %s242, 16
      %s244 = smul.addr %s243, 4
      %s245 = scalar_lea.vmem %s0, %s244
      %p246 = scmp.lt.s32.totalorder %s18, 1
      %s247 = scalar_select %p246, %s18, 1
      %s248 = scalar_lea.vmem %s6, %s247
      %v249 = vld [vmem:[%s245] sm:$0xf]
      %v250 = vld [vmem:[%s245 + $0x4] sm:$0xf]
      %v251 = vld [vmem:[%s245 + $0x8] sm:$0xf]
      %v252 = vld [vmem:[%s245 + $0xc] sm:$0xf]
      %v253 = vld [vmem:[%s245 + $0x10] sm:$0xf]
      %v254 = vld [vmem:[%s245 + $0x14] sm:$0xf]
      %v255 = vld [vmem:[%s245 + $0x18] sm:$0xf]
      %v256 = vld [vmem:[%s245 + $0x1c] sm:$0xf]
      %v257 = vld [vmem:[%s245 + $0x20] sm:$0xf]
      %v258 = vld [vmem:[%s245 + $0x24] sm:$0xf]
      %v259 = vld [vmem:[%s245 + $0x28] sm:$0xf]
      %v260 = vld [vmem:[%s245 + $0x2c] sm:$0xf]
      %v261 = vld [vmem:[%s245 + $0x30] sm:$0xf]
      %v262 = vld [vmem:[%s245 + $0x34] sm:$0xf]
      %v263 = vld [vmem:[%s245 + $0x38] sm:$0xf]
      %v264 = vld [vmem:[%s245 + $0x3c] sm:$0xf]
      %v265 = vunpack.c.l.bf16 %v249
      %v266 = vunpack.c.l.bf16 %v250
      %v267 = vunpack.c.l.bf16 %v251
      %v268 = vunpack.c.l.bf16 %v252
      %v269 = vunpack.c.l.bf16 %v253
      %v270 = vunpack.c.l.bf16 %v254
      %v271 = vunpack.c.l.bf16 %v255
      %v272 = vunpack.c.l.bf16 %v256
      %v273 = vunpack.c.l.bf16 %v257
      %v274 = vunpack.c.l.bf16 %v258
      %v275 = vunpack.c.l.bf16 %v259
      %v276 = vunpack.c.l.bf16 %v260
      %v277 = vunpack.c.l.bf16 %v261
      %v278 = vunpack.c.l.bf16 %v262
      %v279 = vunpack.c.l.bf16 %v263
      %v280 = vunpack.c.l.bf16 %v264
      %281 = vxpose.xlu0.b32.start [1/16] %v265, 128
      %282 = vxpose.xlu0.b32.cont [2/16] %v266, 128
      %283 = vxpose.xlu0.b32.cont [3/16] %v267, 128
      %284 = vxpose.xlu0.b32.cont [4/16] %v268, 128
      %285 = vxpose.xlu0.b32.cont [5/16] %v269, 128
      %286 = vxpose.xlu0.b32.cont [6/16] %v270, 128
      %287 = vxpose.xlu0.b32.cont [7/16] %v271, 128
      %288 = vxpose.xlu0.b32.cont [8/16] %v272, 128
      %289 = vxpose.xlu0.b32.cont [9/16] %v273, 128
      %290 = vxpose.xlu0.b32.cont [10/16] %v274, 128
      %291 = vxpose.xlu0.b32.cont [11/16] %v275, 128
      %292 = vxpose.xlu0.b32.cont [12/16] %v276, 128
      %293 = vxpose.xlu0.b32.cont [13/16] %v277, 128
      %294 = vxpose.xlu0.b32.cont [14/16] %v278, 128
      %295 = vxpose.xlu0.b32.cont [15/16] %v279, 128
      %296 = vxpose.xlu0.b32.end [16/16] %v280, 128
      %v297 = vpop.trf.xlu0
      %v298 = vpop.trf.xlu0
      %v299 = vpop.trf.xlu0
      %v300 = vpop.trf.xlu0
      %v301 = vpop.trf.xlu0
      %v302 = vpop.trf.xlu0
      %v303 = vpop.trf.xlu0
      %v304 = vpop.trf.xlu0
      %v305 = vpop.trf.xlu0
      %v306 = vpop.trf.xlu0
      %v307 = vpop.trf.xlu0
      %v308 = vpop.trf.xlu0
      %v309 = vpop.trf.xlu0
      %v310 = vpop.trf.xlu0
      %v311 = vpop.trf.xlu0
      %v312 = vpop.trf.xlu0
      %v313 = vadd.f32 %v297, %v298
      %v314 = vadd.f32 %v313, %v299
      %v315 = vadd.f32 %v314, %v300
      %v316 = vadd.f32 %v315, %v301
      %v317 = vadd.f32 %v316, %v302
      %v318 = vadd.f32 %v317, %v303
      %v319 = vadd.f32 %v318, %v304
      %v320 = vrot.slane %v319, 4
      %v321 = vadd.f32 %v319, %v320
      %v322 = vrot.slane %v321, 2
      %v323 = vadd.f32 %v321, %v322
      %v324 = vrot.slane %v323, 1
      %v325 = vadd.f32 %v323, %v324
      %v326 = vmul.f32 %v325, 0.015625
      %v327 = vmax.f32 %v297, %v301
      %v328 = vmax.f32 %v298, %v302
      %v329 = vmax.f32 %v299, %v303
      %v330 = vmax.f32 %v300, %v304
      %v331 = vmax.f32 %v327, %v328
      %v332 = vmax.f32 %v329, %v330
      %v333 = vmax.f32 %v331, %v332
      %v334 = vrot.slane %v333, 4
      %v335 = vmax.f32 %v333, %v334
      %v336 = vrot.slane %v335, 2
      %v337 = vmax.f32 %v335, %v336
      %v338 = vrot.slane %v337, 1
      %v339 = vmax.f32 %v337, %v338
      %vm340 = vcmask 1040384
      %v341 = vsel %vm340, %v326, %v339
      %v342 = vld [vmem:[%s1] sm:$0xff]
      %343 = vmatprep.subr.mxu0 0.0
      %344 = vmatpush1.xpose.msra.mxu0 0.0
      %345 = vmatprep.subr.mxu0 0.0
      %346 = vmatpush1.xpose.msra.mxu0 0.0
      %347 = vmatprep.subr.mxu0 0.0
      %348 = vmatpush1.xpose.msra.mxu0 0.0
      %349 = vmatprep.subr.mxu0 0.0
      %350 = vmatpush1.xpose.msra.mxu0 0.0
      %351 = vmatprep.subr.mxu0 0.0
      %352 = vmatpush1.xpose.msra.mxu0 0.0
      %353 = vmatprep.subr.mxu0 0.0
      %354 = vmatpush1.xpose.msra.mxu0 0.0
      %355 = vmatprep.subr.mxu0 0.0
      %356 = vmatpush1.xpose.msra.mxu0 0.0
      %357 = vmatprep.subr.mxu0 0.0
      %358 = vmatpush1.xpose.msra.mxu0 0.0
      %359 = vmatprep.subr.mxu0 0.0
      %360 = vmatpush1.xpose.msra.mxu0 0.0
      %361 = vmatprep.subr.mxu0 0.0
      %362 = vmatpush1.xpose.msra.mxu0 0.0
      %363 = vmatprep.subr.mxu0 0.0
      %364 = vmatpush1.xpose.msra.mxu0 0.0
      %365 = vmatprep.subr.mxu0 0.0
      %366 = vmatpush1.xpose.msra.mxu0 0.0
      %367 = vmatprep.subr.mxu0 0.0
      %368 = vmatpush1.xpose.msra.mxu0 0.0
      %369 = vmatprep.subr.mxu0 0.0
      %370 = vmatpush1.xpose.msra.mxu0 0.0
      %371 = vmatprep.subr.mxu0 0.0
      %372 = vmatpush1.xpose.msra.mxu0 0.0
      %373 = vmatprep.subr.mxu0 0.0
      %374 = vmatpush1.xpose.msra.mxu0 %v342
      %375 = vmatprep.subr.mxu0 0.0
      %376 = vmatpush2.xpose.msra.mxu0 0.0
      %377 = vmatprep.subr.mxu0 0.0
      %378 = vmatpush2.xpose.msra.mxu0 0.0
      %379 = vmatprep.subr.mxu0 0.0
      %380 = vmatpush2.xpose.msra.mxu0 0.0
      %381 = vmatprep.subr.mxu0 0.0
      %382 = vmatpush2.xpose.msra.mxu0 0.0
      %383 = vmatprep.subr.mxu0 0.0
      %384 = vmatpush2.xpose.msra.mxu0 0.0
      %385 = vmatprep.subr.mxu0 0.0
      %386 = vmatpush2.xpose.msra.mxu0 0.0
      %387 = vmatprep.subr.mxu0 0.0
      %388 = vmatpush2.xpose.msra.mxu0 0.0
      %389 = vmatprep.subr.mxu0 0.0
      %390 = vmatpush2.xpose.msra.mxu0 0.0
      %391 = vmatprep.subr.mxu0 0.0
      %392 = vmatpush2.xpose.msra.mxu0 0.0
      %393 = vmatprep.subr.mxu0 0.0
      %394 = vmatpush2.xpose.msra.mxu0 0.0
      %395 = vmatprep.subr.mxu0 0.0
      %396 = vmatpush2.xpose.msra.mxu0 0.0
      %397 = vmatprep.subr.mxu0 0.0
      %398 = vmatpush2.xpose.msra.mxu0 0.0
      %399 = vmatprep.subr.mxu0 0.0
      %400 = vmatpush2.xpose.msra.mxu0 0.0
      %401 = vmatprep.subr.mxu0 0.0
      %402 = vmatpush2.xpose.msra.mxu0 0.0
      %403 = vmatprep.subr.mxu0 0.0
      %404 = vmatpush2.xpose.msra.mxu0 0.0
      %405 = vmatprep.subr.mxu0 0.0
      %406 = vmatpush2.xpose.msra.mxu0 0.0
      %407 = vmatprep.mubr.f32.mxu0 0.0
      %408 = vmatmul.mubr.f32.gmra.mxu0 %v341
      %v409 = vpop.f32.mrf.mxu0
      %v410 = vadd.f32 0.0, %v409
      %v411 = vpop.f32.mrf.mxu0
      %412 = vdwg.mxu0
      %v413 = vmax.f32 %v410, 0.0
      %v414 = vld [vmem:[%s2] sm:$0xff]
      %vm415 = vcmask 64512
      %v417 = vsel %vm415, %v413, 0
      %419 = vmatprep.subr.mxu0 0.0
      %420 = vmatpush1.msra.mxu0 0.0
      %421 = vmatprep.subr.mxu0 0.0
      %422 = vmatpush1.msra.mxu0 0.0
      %423 = vmatprep.subr.mxu0 0.0
      %424 = vmatpush1.msra.mxu0 0.0
      %425 = vmatprep.subr.mxu0 0.0
      %426 = vmatpush1.msra.mxu0 0.0
      %427 = vmatprep.subr.mxu0 0.0
      %428 = vmatpush1.msra.mxu0 0.0
      %429 = vmatprep.subr.mxu0 0.0
      %430 = vmatpush1.msra.mxu0 0.0
      %431 = vmatprep.subr.mxu0 0.0
      %432 = vmatpush1.msra.mxu0 0.0
      %433 = vmatprep.subr.mxu0 0.0
      %434 = vmatpush1.msra.mxu0 0.0
      %435 = vmatprep.subr.mxu0 0.0
      %436 = vmatpush1.msra.mxu0 0.0
      %437 = vmatprep.subr.mxu0 0.0
      %438 = vmatpush1.msra.mxu0 0.0
      %439 = vmatprep.subr.mxu0 0.0
      %440 = vmatpush1.msra.mxu0 0.0
      %441 = vmatprep.subr.mxu0 0.0
      %442 = vmatpush1.msra.mxu0 0.0
      %443 = vmatprep.subr.mxu0 0.0
      %444 = vmatpush1.msra.mxu0 0.0
      %445 = vmatprep.subr.mxu0 0.0
      %446 = vmatpush1.msra.mxu0 0.0
      %447 = vmatprep.subr.mxu0 0.0
      %448 = vmatpush1.msra.mxu0 0.0
      %449 = vmatprep.subr.mxu0 0.0
      %450 = vmatpush1.msra.mxu0 %v414
      %451 = vmatprep.subr.mxu0 0.0
      %452 = vmatpush2.msra.mxu0 0.0
      %453 = vmatprep.subr.mxu0 0.0
      %454 = vmatpush2.msra.mxu0 0.0
      %455 = vmatprep.subr.mxu0 0.0
      %456 = vmatpush2.msra.mxu0 0.0
      %457 = vmatprep.subr.mxu0 0.0
      %458 = vmatpush2.msra.mxu0 0.0
      %459 = vmatprep.subr.mxu0 0.0
      %460 = vmatpush2.msra.mxu0 0.0
      %461 = vmatprep.subr.mxu0 0.0
      %462 = vmatpush2.msra.mxu0 0.0
      %463 = vmatprep.subr.mxu0 0.0
      %464 = vmatpush2.msra.mxu0 0.0
      %465 = vmatprep.subr.mxu0 0.0
      %466 = vmatpush2.msra.mxu0 0.0
      %467 = vmatprep.subr.mxu0 0.0
      %468 = vmatpush2.msra.mxu0 0.0
      %469 = vmatprep.subr.mxu0 0.0
      %470 = vmatpush2.msra.mxu0 0.0
      %471 = vmatprep.subr.mxu0 0.0
      %472 = vmatpush2.msra.mxu0 0.0
      %473 = vmatprep.subr.mxu0 0.0
      %474 = vmatpush2.msra.mxu0 0.0
      %475 = vmatprep.subr.mxu0 0.0
      %476 = vmatpush2.msra.mxu0 0.0
      %477 = vmatprep.subr.mxu0 0.0
      %478 = vmatpush2.msra.mxu0 0.0
      %479 = vmatprep.subr.mxu0 0.0
      %480 = vmatpush2.msra.mxu0 0.0
      %481 = vmatprep.subr.mxu0 0.0
      %482 = vmatpush2.msra.mxu0 0.0
      %483 = vmatprep.mubr.f32.mxu0 0.0
      %484 = vmatmul.mubr.f32.gmra.mxu0 %v417
      %v485 = vpop.f32.mrf.mxu0
      %v486 = vadd.f32 0.0, %v485
      %v487 = vpop.f32.mrf.mxu0
      %488 = vdwg.mxu0
      %v490 = vrot.slane %v486, 1
      %v492 = vadd.f32 %v486, %v490
      %v493 = vxor.u32 %v492, 2147483648
      %v494 = vmul.f32 %v493, 1.442695
      %v495 = vpow.pop %v494
      %v496 = vadd.f32 %v495, 1.0
      %v497 = vrcp.pop %v496
      %v498 = vmul.f32 1.0, %v497
      %v499 = vlaneseq
      %v500 = vshrl.u32 %v499, 7
      %v501 = vsub.s32 0, %v500
      %v502 = vrot.slane %v498, %v501
      %v503 = vmul.f32 %v297, %v502
      %v504 = vmul.f32 %v298, %v502
      %v505 = vmul.f32 %v299, %v502
      %v506 = vmul.f32 %v300, %v502
      %v507 = vmul.f32 %v301, %v502
      %v508 = vmul.f32 %v302, %v502
      %v509 = vmul.f32 %v303, %v502
      %v510 = vmul.f32 %v304, %v502
      %v511 = vld [vmem:[%s4] sm:$0xff]
      %v512 = vld [vmem:[%s4 + $0x8] sm:$0xff]
      %v513 = vld [vmem:[%s4 + $0x10] sm:$0xff]
      %v514 = vld [vmem:[%s4 + $0x18] sm:$0xff]
      %v515 = vld [vmem:[%s4 + $0x20] sm:$0xff]
      %v516 = vld [vmem:[%s4 + $0x28] sm:$0xff]
      %v517 = vld [vmem:[%s4 + $0x30] sm:$0xff]
      %v518 = vld [vmem:[%s4 + $0x38] sm:$0xff]
      %v519 = vld [vmem:[%s4 + $0x40] sm:$0xff]
      %v520 = vld [vmem:[%s4 + $0x48] sm:$0xff]
      %v521 = vld [vmem:[%s4 + $0x50] sm:$0xff]
      %v522 = vld [vmem:[%s4 + $0x58] sm:$0xff]
      %v523 = vld [vmem:[%s4 + $0x60] sm:$0xff]
      %v524 = vld [vmem:[%s4 + $0x68] sm:$0xff]
      %v525 = vld [vmem:[%s4 + $0x70] sm:$0xff]
      %v526 = vld [vmem:[%s4 + $0x78] sm:$0xff]
      %527 = vmatprep.subr.mxu0 0.0
      %528 = vmatpush1.msra.mxu0 %v526
      %529 = vmatprep.subr.mxu0 0.0
      %530 = vmatpush1.msra.mxu0 %v525
      %531 = vmatprep.subr.mxu0 0.0
      %532 = vmatpush1.msra.mxu0 %v524
      %533 = vmatprep.subr.mxu0 0.0
      %534 = vmatpush1.msra.mxu0 %v523
      %535 = vmatprep.subr.mxu0 0.0
      %536 = vmatpush1.msra.mxu0 %v522
      %537 = vmatprep.subr.mxu0 0.0
      %538 = vmatpush1.msra.mxu0 %v521
      %539 = vmatprep.subr.mxu0 0.0
      %540 = vmatpush1.msra.mxu0 %v520
      %541 = vmatprep.subr.mxu0 0.0
      %542 = vmatpush1.msra.mxu0 %v519
      %543 = vmatprep.subr.mxu0 0.0
      %544 = vmatpush1.msra.mxu0 %v518
      %545 = vmatprep.subr.mxu0 0.0
      %546 = vmatpush1.msra.mxu0 %v517
      %547 = vmatprep.subr.mxu0 0.0
      %548 = vmatpush1.msra.mxu0 %v516
      %549 = vmatprep.subr.mxu0 0.0
      %550 = vmatpush1.msra.mxu0 %v515
      %551 = vmatprep.subr.mxu0 0.0
      %552 = vmatpush1.msra.mxu0 %v514
      %553 = vmatprep.subr.mxu0 0.0
      %554 = vmatpush1.msra.mxu0 %v513
      %555 = vmatprep.subr.mxu0 0.0
      %556 = vmatpush1.msra.mxu0 %v512
      %557 = vmatprep.subr.mxu0 0.0
      %558 = vmatpush1.msra.mxu0 %v511
      %559 = vmatprep.subr.mxu0 0.0
      %560 = vmatpush2.msra.mxu0 0.0
      %561 = vmatprep.subr.mxu0 0.0
      %562 = vmatpush2.msra.mxu0 0.0
      %563 = vmatprep.subr.mxu0 0.0
      %564 = vmatpush2.msra.mxu0 0.0
      %565 = vmatprep.subr.mxu0 0.0
      %566 = vmatpush2.msra.mxu0 0.0
      %567 = vmatprep.subr.mxu0 0.0
      %568 = vmatpush2.msra.mxu0 0.0
      %569 = vmatprep.subr.mxu0 0.0
      %570 = vmatpush2.msra.mxu0 0.0
      %571 = vmatprep.subr.mxu0 0.0
      %572 = vmatpush2.msra.mxu0 0.0
      %573 = vmatprep.subr.mxu0 0.0
      %574 = vmatpush2.msra.mxu0 0.0
      %575 = vmatprep.subr.mxu0 0.0
      %576 = vmatpush2.msra.mxu0 0.0
      %577 = vmatprep.subr.mxu0 0.0
      %578 = vmatpush2.msra.mxu0 0.0
      %579 = vmatprep.subr.mxu0 0.0
      %580 = vmatpush2.msra.mxu0 0.0
      %581 = vmatprep.subr.mxu0 0.0
      %582 = vmatpush2.msra.mxu0 0.0
      %583 = vmatprep.subr.mxu0 0.0
      %584 = vmatpush2.msra.mxu0 0.0
      %585 = vmatprep.subr.mxu0 0.0
      %586 = vmatpush2.msra.mxu0 0.0
      %587 = vmatprep.subr.mxu0 0.0
      %588 = vmatpush2.msra.mxu0 0.0
      %589 = vmatprep.subr.mxu0 0.0
      %590 = vmatpush2.msra.mxu0 0.0
      %591 = vmatprep.mubr.f32.mxu0 0.0
      %592 = vmatmul.mubr.f32.gmra.mxu0 %v503
      %v593 = vpop.f32.mrf.mxu0
      %v594 = vadd.f32 0.0, %v593
      %v595 = vpop.f32.mrf.mxu0
      %596 = vmatprep.mubr.f32.mxu0 0.0
      %597 = vmatmul.mubr.f32.gmra.mxu0 %v504
      %v598 = vpop.f32.mrf.mxu0
      %v599 = vadd.f32 0.0, %v598
      %v600 = vpop.f32.mrf.mxu0
      %601 = vmatprep.mubr.f32.mxu0 0.0
      %602 = vmatmul.mubr.f32.gmra.mxu0 %v505
      %v603 = vpop.f32.mrf.mxu0
      %v604 = vadd.f32 0.0, %v603
      %v605 = vpop.f32.mrf.mxu0
      %606 = vmatprep.mubr.f32.mxu0 0.0
      %607 = vmatmul.mubr.f32.gmra.mxu0 %v506
      %v608 = vpop.f32.mrf.mxu0
      %v609 = vadd.f32 0.0, %v608
      %v610 = vpop.f32.mrf.mxu0
      %611 = vmatprep.mubr.f32.mxu0 0.0
      %612 = vmatmul.mubr.f32.gmra.mxu0 %v507
      %v613 = vpop.f32.mrf.mxu0
      %v614 = vadd.f32 0.0, %v613
      %v615 = vpop.f32.mrf.mxu0
      %616 = vmatprep.mubr.f32.mxu0 0.0
      %617 = vmatmul.mubr.f32.gmra.mxu0 %v508
      %v618 = vpop.f32.mrf.mxu0
      %v619 = vadd.f32 0.0, %v618
      %v620 = vpop.f32.mrf.mxu0
      %621 = vmatprep.mubr.f32.mxu0 0.0
      %622 = vmatmul.mubr.f32.gmra.mxu0 %v509
      %v623 = vpop.f32.mrf.mxu0
      %v624 = vadd.f32 0.0, %v623
      %v625 = vpop.f32.mrf.mxu0
      %626 = vmatprep.mubr.f32.mxu0 0.0
      %627 = vmatmul.mubr.f32.gmra.mxu0 %v510
      %v628 = vpop.f32.mrf.mxu0
      %v629 = vadd.f32 0.0, %v628
      %v630 = vpop.f32.mrf.mxu0
      %631 = vdwg.mxu0
      %632 = vmax.xlane.f32.xlu0 %v503
      %v633 = vpop.xlane.xlu0 %632
      %634 = vmax.xlane.f32.xlu0 %v504
      %v635 = vpop.xlane.xlu0 %634
      %636 = vmax.xlane.f32.xlu0 %v505
      %v637 = vpop.xlane.xlu0 %636
      %638 = vmax.xlane.f32.xlu0 %v506
      %v639 = vpop.xlane.xlu0 %638
      %640 = vmax.xlane.f32.xlu0 %v507
      %v641 = vpop.xlane.xlu0 %640
      %642 = vmax.xlane.f32.xlu0 %v508
      %v643 = vpop.xlane.xlu0 %642
      %644 = vmax.xlane.f32.xlu0 %v509
      %v645 = vpop.xlane.xlu0 %644
      %646 = vmax.xlane.f32.xlu0 %v510
      %v647 = vpop.xlane.xlu0 %646
      %656 = vset.pattern.permute.xlu0 0
      %657 = vperm.xlu0 %656, %v594
      %v658 = vpop.permute.xlu0 %657
      %659 = vset.pattern.permute.xlu0 0
      %660 = vperm.xlu0 %659, %v599
      %v661 = vpop.permute.xlu0 %660
      %662 = vset.pattern.permute.xlu0 0
      %663 = vperm.xlu0 %662, %v604
      %v664 = vpop.permute.xlu0 %663
      %665 = vset.pattern.permute.xlu0 0
      %666 = vperm.xlu0 %665, %v609
      %v667 = vpop.permute.xlu0 %666
      %668 = vset.pattern.permute.xlu0 0
      %669 = vperm.xlu0 %668, %v614
      %v670 = vpop.permute.xlu0 %669
      %671 = vset.pattern.permute.xlu0 0
      %672 = vperm.xlu0 %671, %v619
      %v673 = vpop.permute.xlu0 %672
      %674 = vset.pattern.permute.xlu0 0
      %675 = vperm.xlu0 %674, %v624
      %v676 = vpop.permute.xlu0 %675
      %677 = vset.pattern.permute.xlu0 0
      %678 = vperm.xlu0 %677, %v629
      %v679 = vpop.permute.xlu0 %678
      %v680 = vlaneseq
      %v681 = vand.u32 %v680, 127
      %v682 = vlaneseq
      %v683 = vshrl.u32 %v682, 7
      %v684 = vsub.s32 %v681, %v683
      %v685 = vrot.slane %v658, %v684
      %v686 = vadd.s32 %v681, 4294967288
      %v687 = vlaneseq
      %v688 = vshrl.u32 %v687, 7
      %v689 = vsub.s32 %v686, %v688
      %v690 = vrot.slane %v661, %v689
      %vm691 = vcmask 130112
      %v692 = vsel %vm691, %v690, %v685
      %v693 = vadd.s32 %v681, 4294967280
      %v694 = vlaneseq
      %v695 = vshrl.u32 %v694, 7
      %v696 = vsub.s32 %v693, %v695
      %v697 = vrot.slane %v664, %v696
      %vm698 = vcmask 195712
      %v699 = vsel %vm698, %v697, %v692
      %v700 = vadd.s32 %v681, 4294967272
      %v701 = vlaneseq
      %v702 = vshrl.u32 %v701, 7
      %v703 = vsub.s32 %v700, %v702
      %v704 = vrot.slane %v667, %v703
      %vm705 = vcmask 261312
      %v706 = vsel %vm705, %v704, %v699
      %v707 = vadd.s32 %v681, 4294967264
      %v708 = vlaneseq
      %v709 = vshrl.u32 %v708, 7
      %v710 = vsub.s32 %v707, %v709
      %v711 = vrot.slane %v670, %v710
      %vm712 = vcmask 326912
      %v713 = vsel %vm712, %v711, %v706
      %v714 = vadd.s32 %v681, 4294967256
      %v715 = vlaneseq
      %v716 = vshrl.u32 %v715, 7
      %v717 = vsub.s32 %v714, %v716
      %v718 = vrot.slane %v673, %v717
      %vm719 = vcmask 392512
      %v720 = vsel %vm719, %v718, %v713
      %v721 = vadd.s32 %v681, 4294967248
      %v722 = vlaneseq
      %v723 = vshrl.u32 %v722, 7
      %v724 = vsub.s32 %v721, %v723
      %v725 = vrot.slane %v676, %v724
      %vm726 = vcmask 458112
      %v727 = vsel %vm726, %v725, %v720
      %v728 = vadd.s32 %v681, 4294967240
      %v729 = vlaneseq
      %v730 = vshrl.u32 %v729, 7
      %v731 = vsub.s32 %v728, %v730
      %v732 = vrot.slane %v679, %v731
      %vm733 = vcmask 523712
      %v734 = vsel %vm733, %v732, %v727
      %v744 = vadd.s32 %v681, 4294967232
      %v745 = vlaneseq
      %v746 = vshrl.u32 %v745, 7
      %v747 = vsub.s32 %v744, %v746
      %v748 = vrot.slane %v633, %v747
      %v749 = vadd.s32 %v681, 4294967224
      %v750 = vlaneseq
      %v751 = vshrl.u32 %v750, 7
      %v752 = vsub.s32 %v749, %v751
      %v753 = vrot.slane %v635, %v752
      %vm754 = vcmask 654912
      %v755 = vsel %vm754, %v753, %v748
      %v756 = vadd.s32 %v681, 4294967216
      %v757 = vlaneseq
      %v758 = vshrl.u32 %v757, 7
      %v759 = vsub.s32 %v756, %v758
      %v760 = vrot.slane %v637, %v759
      %vm761 = vcmask 720512
      %v762 = vsel %vm761, %v760, %v755
      %v763 = vadd.s32 %v681, 4294967208
      %v764 = vlaneseq
      %v765 = vshrl.u32 %v764, 7
      %v766 = vsub.s32 %v763, %v765
      %v767 = vrot.slane %v639, %v766
      %vm768 = vcmask 786112
      %v769 = vsel %vm768, %v767, %v762
      %v770 = vadd.s32 %v681, 4294967200
      %v771 = vlaneseq
      %v772 = vshrl.u32 %v771, 7
      %v773 = vsub.s32 %v770, %v772
      %v774 = vrot.slane %v641, %v773
      %vm775 = vcmask 851712
      %v776 = vsel %vm775, %v774, %v769
      %v777 = vadd.s32 %v681, 4294967192
      %v778 = vlaneseq
      %v779 = vshrl.u32 %v778, 7
      %v780 = vsub.s32 %v777, %v779
      %v781 = vrot.slane %v643, %v780
      %vm782 = vcmask 917312
      %v783 = vsel %vm782, %v781, %v776
      %v784 = vadd.s32 %v681, 4294967184
      %v785 = vlaneseq
      %v786 = vshrl.u32 %v785, 7
      %v787 = vsub.s32 %v784, %v786
      %v788 = vrot.slane %v645, %v787
      %vm789 = vcmask 982912
      %v790 = vsel %vm789, %v788, %v783
      %v791 = vadd.s32 %v681, 4294967176
      %v792 = vlaneseq
      %v793 = vshrl.u32 %v792, 7
      %v794 = vsub.s32 %v791, %v793
      %v795 = vrot.slane %v647, %v794
      %vm796 = vcmask 1048512
      %v797 = vsel %vm796, %v795, %v790
      %vm799 = vcmask 523264
      %v800 = vsel %vm799, %v734, %v797
      %v801 = vld [vmem:[%s3] sm:$0xff]
      %v802 = vld [vmem:[%s3 + $0x8] sm:$0xff]
      %v803 = vld [vmem:[%s3 + $0x10] sm:$0xff]
      %v804 = vld [vmem:[%s3 + $0x18] sm:$0xff]
      %v805 = vld [vmem:[%s3 + $0x20] sm:$0xff]
      %v806 = vld [vmem:[%s3 + $0x28] sm:$0xff]
      %v807 = vld [vmem:[%s3 + $0x30] sm:$0xff]
      %v808 = vld [vmem:[%s3 + $0x38] sm:$0xff]
      %v809 = vld [vmem:[%s3 + $0x40] sm:$0xff]
      %v810 = vld [vmem:[%s3 + $0x48] sm:$0xff]
      %v811 = vld [vmem:[%s3 + $0x50] sm:$0xff]
      %v812 = vld [vmem:[%s3 + $0x58] sm:$0xff]
      %v813 = vld [vmem:[%s3 + $0x60] sm:$0xff]
      %v814 = vld [vmem:[%s3 + $0x68] sm:$0xff]
      %v815 = vld [vmem:[%s3 + $0x70] sm:$0xff]
      %v816 = vld [vmem:[%s3 + $0x78] sm:$0xff]
      %817 = vmatprep.subr.mxu0 0.0
      %818 = vmatpush1.msra.mxu0 %v816
      %819 = vmatprep.subr.mxu0 0.0
      %820 = vmatpush1.msra.mxu0 %v815
      %821 = vmatprep.subr.mxu0 0.0
      %822 = vmatpush1.msra.mxu0 %v814
      %823 = vmatprep.subr.mxu0 0.0
      %824 = vmatpush1.msra.mxu0 %v813
      %825 = vmatprep.subr.mxu0 0.0
      %826 = vmatpush1.msra.mxu0 %v812
      %827 = vmatprep.subr.mxu0 0.0
      %828 = vmatpush1.msra.mxu0 %v811
      %829 = vmatprep.subr.mxu0 0.0
      %830 = vmatpush1.msra.mxu0 %v810
      %831 = vmatprep.subr.mxu0 0.0
      %832 = vmatpush1.msra.mxu0 %v809
      %833 = vmatprep.subr.mxu0 0.0
      %834 = vmatpush1.msra.mxu0 %v808
      %835 = vmatprep.subr.mxu0 0.0
      %836 = vmatpush1.msra.mxu0 %v807
      %837 = vmatprep.subr.mxu0 0.0
      %838 = vmatpush1.msra.mxu0 %v806
      %839 = vmatprep.subr.mxu0 0.0
      %840 = vmatpush1.msra.mxu0 %v805
      %841 = vmatprep.subr.mxu0 0.0
      %842 = vmatpush1.msra.mxu0 %v804
      %843 = vmatprep.subr.mxu0 0.0
      %844 = vmatpush1.msra.mxu0 %v803
      %845 = vmatprep.subr.mxu0 0.0
      %846 = vmatpush1.msra.mxu0 %v802
      %847 = vmatprep.subr.mxu0 0.0
      %848 = vmatpush1.msra.mxu0 %v801
      %849 = vmatprep.subr.mxu0 0.0
      %850 = vmatpush2.msra.mxu0 0.0
      %851 = vmatprep.subr.mxu0 0.0
      %852 = vmatpush2.msra.mxu0 0.0
      %853 = vmatprep.subr.mxu0 0.0
      %854 = vmatpush2.msra.mxu0 0.0
      %855 = vmatprep.subr.mxu0 0.0
      %856 = vmatpush2.msra.mxu0 0.0
      %857 = vmatprep.subr.mxu0 0.0
      %858 = vmatpush2.msra.mxu0 0.0
      %859 = vmatprep.subr.mxu0 0.0
      %860 = vmatpush2.msra.mxu0 0.0
      %861 = vmatprep.subr.mxu0 0.0
      %862 = vmatpush2.msra.mxu0 0.0
      %863 = vmatprep.subr.mxu0 0.0
      %864 = vmatpush2.msra.mxu0 0.0
      %865 = vmatprep.subr.mxu0 0.0
      %866 = vmatpush2.msra.mxu0 0.0
      %867 = vmatprep.subr.mxu0 0.0
      %868 = vmatpush2.msra.mxu0 0.0
      %869 = vmatprep.subr.mxu0 0.0
      %870 = vmatpush2.msra.mxu0 0.0
      %871 = vmatprep.subr.mxu0 0.0
      %872 = vmatpush2.msra.mxu0 0.0
      %873 = vmatprep.subr.mxu0 0.0
      %874 = vmatpush2.msra.mxu0 0.0
      %875 = vmatprep.subr.mxu0 0.0
      %876 = vmatpush2.msra.mxu0 0.0
      %877 = vmatprep.subr.mxu0 0.0
      %878 = vmatpush2.msra.mxu0 0.0
      %879 = vmatprep.subr.mxu0 0.0
      %880 = vmatpush2.msra.mxu0 0.0
      %881 = vmatprep.mubr.f32.mxu0 0.0
      %882 = vmatmul.mubr.f32.gmra.mxu0 %v800
      %v883 = vpop.f32.mrf.mxu0
      %v884 = vadd.f32 0.0, %v883
      %v885 = vpop.f32.mrf.mxu0
      %886 = vdwg.mxu0
      %v887 = vxor.u32 %v884, 2147483648
      %v888 = vmul.f32 %v887, 1.442695
      %v889 = vpow.pop %v888
      %v890 = vadd.f32 %v889, 1.0
      %v891 = vrcp.pop %v890
      %v892 = vmul.f32 1.0, %v891
      %893 = vset.pattern.permute.xlu0 1
      %894 = vperm.xlu0 %893, %v594
      %v895 = vpop.permute.xlu0 %894
      %896 = vset.pattern.permute.xlu0 1
      %897 = vperm.xlu0 %896, %v599
      %v898 = vpop.permute.xlu0 %897
      %899 = vset.pattern.permute.xlu0 1
      %900 = vperm.xlu0 %899, %v604
      %v901 = vpop.permute.xlu0 %900
      %902 = vset.pattern.permute.xlu0 1
      %903 = vperm.xlu0 %902, %v609
      %v904 = vpop.permute.xlu0 %903
      %905 = vset.pattern.permute.xlu0 1
      %906 = vperm.xlu0 %905, %v614
      %v907 = vpop.permute.xlu0 %906
      %908 = vset.pattern.permute.xlu0 1
      %909 = vperm.xlu0 %908, %v619
      %v910 = vpop.permute.xlu0 %909
      %911 = vset.pattern.permute.xlu0 1
      %912 = vperm.xlu0 %911, %v624
      %v913 = vpop.permute.xlu0 %912
      %914 = vset.pattern.permute.xlu0 1
      %915 = vperm.xlu0 %914, %v629
      %v916 = vpop.permute.xlu0 %915
      %v917 = vlaneseq
      %v918 = vshrl.u32 %v917, 7
      %v919 = vsub.s32 %v681, %v918
      %v920 = vrot.slane %v895, %v919
      %v921 = vlaneseq
      %v922 = vshrl.u32 %v921, 7
      %v923 = vsub.s32 %v686, %v922
      %v924 = vrot.slane %v898, %v923
      %v925 = vsel %vm691, %v924, %v920
      %v926 = vlaneseq
      %v927 = vshrl.u32 %v926, 7
      %v928 = vsub.s32 %v693, %v927
      %v929 = vrot.slane %v901, %v928
      %v930 = vsel %vm698, %v929, %v925
      %v931 = vlaneseq
      %v932 = vshrl.u32 %v931, 7
      %v933 = vsub.s32 %v700, %v932
      %v934 = vrot.slane %v904, %v933
      %v935 = vsel %vm705, %v934, %v930
      %v936 = vlaneseq
      %v937 = vshrl.u32 %v936, 7
      %v938 = vsub.s32 %v707, %v937
      %v939 = vrot.slane %v907, %v938
      %v940 = vsel %vm712, %v939, %v935
      %v941 = vlaneseq
      %v942 = vshrl.u32 %v941, 7
      %v943 = vsub.s32 %v714, %v942
      %v944 = vrot.slane %v910, %v943
      %v945 = vsel %vm719, %v944, %v940
      %v946 = vlaneseq
      %v947 = vshrl.u32 %v946, 7
      %v948 = vsub.s32 %v721, %v947
      %v949 = vrot.slane %v913, %v948
      %v950 = vsel %vm726, %v949, %v945
      %v951 = vlaneseq
      %v952 = vshrl.u32 %v951, 7
      %v953 = vsub.s32 %v728, %v952
      %v954 = vrot.slane %v916, %v953
      %v955 = vsel %vm733, %v954, %v950
      %v957 = vmul.f32 %v892, %v955
      %vm958 = vcmask 516096
      %v959 = vsel %vm958, %v957, 0.0
      %960 = vadd.xlane.f32.xlu0 %v959
      %v961 = vpop.xlane.xlu0 %960
      %v962 = vmul.f32 %v961, 0.015625
      %s963 = sld [smem:[#allocation2]]
      %v964 = vstv %s963
      %v965 = vadd.f32 %v962, %v964
      %vm966 = vcmask 0
      %967 = vst.msk [vmem:[%s248] sm:$0x1] %vm966, %v965
      %p968 = scmp.lt.s32.totalorder %s18, 1
      %s969 = scalar_select %p968, %s18, 1
      %s970 = scalar_lea.vmem %s6, %s969
      // Predicated region
      $region45: #{tpu_custom_call.1} parent=43 // pred_check
        %p971 = pneg %p167
      $region46: #{tpu_custom_call.1} parent=43 // pred_check_branch
        %973 = sbr.rel (%p971) target = $region48
      $region47: #{tpu_custom_call.1} parent=43 // pred_region
        _
      $region48: #{tpu_custom_call.1} parent=43 // pred_fallthru
        _
    $region44: #{tpu_custom_call.1} parent=5 // pred_fallthru
      _
    %p974 = scmp.le.s32.totalorder 2, %s13
    // Predicated region
    $region49: #{tpu_custom_call.1} parent=5 // pred_check
      %p975 = pneg %p974
    $region50: #{tpu_custom_call.1} parent=5 // pred_check_branch
      %977 = sbr.rel (%p975) target = $region52
    $region51: #{tpu_custom_call.1} parent=5 // pred_region
      %s978 = ssub.s32 %s13, 2
      // Predicated region
      $region53: #{tpu_custom_call.1} parent=51 // pred_check
        %p979 = pneg %p173
      $region54: #{tpu_custom_call.1} parent=51 // pred_check_branch
        %981 = sbr.rel (%p979) target = $region56
      $region55: #{tpu_custom_call.1} parent=51 // pred_region
        %p982 = scmp.lt.s32.totalorder %s19, 1
        %s983 = scalar_select %p982, %s19, 1
        %s984 = scalar_lea.vmem %s6, %s983
      $region56: #{tpu_custom_call.1} parent=51 // pred_fallthru
        _
    $region52: #{tpu_custom_call.1} parent=5 // pred_fallthru
      _
  $region6: #{tpu_custom_call.1} parent=0 // loop_footer
    %s17 = sadd.s32 1, %s13
  $region7: #{tpu_custom_call.1} parent=0 // loop_footer_branch
    %12 = sbr.rel target = $region3
  $region8: #{tpu_custom_call.1} parent=0 // loop_exit
    _

</llo_original>
